<compile_context>
chip_gen: v7x
topology: tpu7x:2x2x1
jax: 0.10.0
libtpu: 0.0.40
codegen_flags: <defaults>
</compile_context>

<pallas_src>
import jax
import jax.numpy as jnp
from jax.experimental import pallas as pl
from jax.experimental.pallas import tpu as pltpu

IN_DIM = 20
HID_DIM = 200
OUT_DIM = 20

_MAX_TILE_B = 2048  # per-tile f32 footprint: x 160 KiB, h 1.6 MiB, y 160 KiB


def _round_up(n: int, m: int) -> int:
    return -(-n // m) * m


def _choose_tile_b(batch: int) -> int:
    """Pick the batch tile size (static, shape-derived).

    * batch <= 1024: one tile equal to the full batch (block == full array dim is
      always a legal block shape, even if batch is not a multiple of 8).
    * larger batches: tiles of up to _MAX_TILE_B rows with an even tile count so the
      "parallel" grid axis load-balances across both TensorCores on v7x.  Tiles are
      rounded up to the sublane multiple (8); the ragged last tile is masked by
      Pallas on write, so no explicit padding pass is needed.
    """
    if batch <= 1024:
        return batch
    n_tiles = max(2, pl.cdiv(batch, _MAX_TILE_B))
    if n_tiles % 2:
        n_tiles += 1
    return _round_up(pl.cdiv(batch, n_tiles), 8)


def uni_feature_kernel(x_ref, w1_ref, b1_ref, w2_ref, b2_ref, o_ref):
    # x_ref:  (TILE_B, IN_DIM)   f32   (batch tile, natural layout)
    # w1_ref: (IN_DIM, HID_DIM)  f32   (VMEM-resident)
    # b1_ref: (1, HID_DIM)       f32   (VMEM-resident)
    # w2_ref: (HID_DIM, OUT_DIM) f32   (VMEM-resident)
    # b2_ref: (1, OUT_DIM)       f32   (VMEM-resident)
    # o_ref:  (TILE_B, OUT_DIM)  f32
    h = jnp.dot(x_ref[...], w1_ref[...], preferred_element_type=jnp.float32)
    h = jnp.maximum(h + b1_ref[...], 0.0)                 # bias + ReLU (VPU)
    y = jnp.dot(h, w2_ref[...], preferred_element_type=jnp.float32)
    o_ref[...] = jax.nn.sigmoid(y + b2_ref[...]).astype(o_ref.dtype)  # sigmoid (EUP)


@jax.jit
def uni_feature_forward(x, w1, b1, w2, b2):
    """x: (B, 20) f32; w1: (20, 200); b1: (200,); w2: (200, 20); b2: (20,)."""
    B = x.shape[0]
    tile_b = _choose_tile_b(B)
    num_tiles = pl.cdiv(B, tile_b)

    x = x.astype(jnp.float32)
    w1 = w1.astype(jnp.float32)
    w2 = w2.astype(jnp.float32)
    b1c = b1.reshape(1, HID_DIM).astype(jnp.float32)
    b2c = b2.reshape(1, OUT_DIM).astype(jnp.float32)

    flops = 2 * B * (IN_DIM * HID_DIM + HID_DIM * OUT_DIM)
    bytes_accessed = (
        B * IN_DIM * 4                                   # x in (f32)
        + B * OUT_DIM * 4                                # y out (f32)
        + (IN_DIM * HID_DIM + HID_DIM * OUT_DIM) * 4     # weights
        + (HID_DIM + OUT_DIM) * 4                        # biases
    )

    return pl.pallas_call(
        uni_feature_kernel,
        out_shape=jax.ShapeDtypeStruct((B, OUT_DIM), jnp.float32),
        grid_spec=pl.GridSpec(
            grid=(num_tiles,),
            in_specs=[
                pl.BlockSpec((tile_b, IN_DIM), lambda i: (i, 0)),      # x tile
                pl.BlockSpec((IN_DIM, HID_DIM), lambda i: (0, 0)),     # W1 (resident)
                pl.BlockSpec((1, HID_DIM), lambda i: (0, 0)),          # b1 (resident)
                pl.BlockSpec((HID_DIM, OUT_DIM), lambda i: (0, 0)),    # W2 (resident)
                pl.BlockSpec((1, OUT_DIM), lambda i: (0, 0)),          # b2 (resident)
            ],
            out_specs=pl.BlockSpec((tile_b, OUT_DIM), lambda i: (i, 0)),
        ),
        compiler_params=pltpu.CompilerParams(
            dimension_semantics=("parallel",),     # batch tiles independent (megacore)
            vmem_limit_bytes=32 * 1024 * 1024,     # safe on v5e/v6e/v7x; tiles ~2 MiB
        ),
        cost_estimate=pl.CostEstimate(
            flops=flops,
            transcendentals=B * OUT_DIM,           # sigmoid
            bytes_accessed=bytes_accessed,
        ),
    )(x, w1, b1c, w2, b2c)


def init_params(key):
    # Deterministic init mimicking PyTorch nn.Linear default:
    # uniform(-1/sqrt(fan_in), 1/sqrt(fan_in)). Weights stored as (in, out).
    k1, k2, k3, k4 = jax.random.split(key, 4)
    bound1 = 1.0 / jnp.sqrt(IN_DIM)
    bound2 = 1.0 / jnp.sqrt(HID_DIM)
    w1 = jax.random.uniform(k1, (IN_DIM, HID_DIM), jnp.float32, -bound1, bound1)
    b1 = jax.random.uniform(k2, (HID_DIM,), jnp.float32, -bound1, bound1)
    w2 = jax.random.uniform(k3, (HID_DIM, OUT_DIM), jnp.float32, -bound2, bound2)
    b2 = jax.random.uniform(k4, (OUT_DIM,), jnp.float32, -bound2, bound2)
    return w1, b1, w2, b2


def reference_forward(x, w1, b1, w2, b2):
    h = jnp.maximum(x @ w1 + b1[None, :], 0.0)
    return jax.nn.sigmoid(h @ w2 + b2[None, :])


if __name__ == "__main__":
    key = jax.random.PRNGKey(0)
    kx, kp, kx2 = jax.random.split(key, 3)
    w1, b1, w2, b2 = init_params(kp)

    # Small test: single tile, batch not a multiple of 8 (block == full dim path).
    B = 8
    x = jax.random.normal(kx, (B, IN_DIM), jnp.float32)
    out = jax.block_until_ready(uni_feature_forward(x, w1, b1, w2, b2))
    ref = reference_forward(x, w1, b1, w2, b2)
    assert out.shape == (B, OUT_DIM)
    assert jnp.allclose(out, ref, atol=1e-3, rtol=1e-3), float(jnp.max(jnp.abs(out - ref)))

    # Multi-tile test: 2 tiles, ragged last tile masked by Pallas (no explicit pad).
    B2 = 1500
    x2 = jax.random.normal(kx2, (B2, IN_DIM), jnp.float32)
    out2 = jax.block_until_ready(uni_feature_forward(x2, w1, b1, w2, b2))
    ref2 = reference_forward(x2, w1, b1, w2, b2)
    assert out2.shape == (B2, OUT_DIM)
    assert jnp.allclose(out2, ref2, atol=1e-3, rtol=1e-3), float(jnp.max(jnp.abs(out2 - ref2)))

    print("KERNEL_OK")
</pallas_src>

<mosaic_0001>
module attributes {stable_mosaic.version = 11 : i64} {
  func.func @uni_feature_kernel(%arg0: i32, %arg1: memref<8x20xf32, #tpu.memory_space<vmem>>, %arg2: memref<20x200xf32, #tpu.memory_space<vmem>>, %arg3: memref<1x200xf32, #tpu.memory_space<vmem>>, %arg4: memref<200x20xf32, #tpu.memory_space<vmem>>, %arg5: memref<1x20xf32, #tpu.memory_space<vmem>>, %arg6: memref<8x20xf32, #tpu.memory_space<vmem>>) attributes {dimension_semantics = [#tpu.dimension_semantics<parallel>], iteration_bounds = array<i64: 1>, scalar_prefetch = 0 : i64, scratch_operands = 0 : i64, tpu.core_type = #tpu.core_type<tc>, window_params = [{transform_indices = @transform_0, window_bounds = array<i64: 8, 20>}, {pipeline_mode = #tpu.pipeline_mode<synchronous>, transform_indices = @transform_1, window_bounds = array<i64: 20, 200>}, {pipeline_mode = #tpu.pipeline_mode<synchronous>, transform_indices = @transform_2, window_bounds = array<i64: 1, 200>}, {pipeline_mode = #tpu.pipeline_mode<synchronous>, transform_indices = @transform_3, window_bounds = array<i64: 200, 20>}, {pipeline_mode = #tpu.pipeline_mode<synchronous>, transform_indices = @transform_4, window_bounds = array<i64: 1, 20>}, {transform_indices = @transform_5, window_bounds = array<i64: 8, 20>}]} {
    %c0 = arith.constant 0 : index
    %c0_0 = arith.constant 0 : index
    %0 = vector.load %arg1[%c0, %c0_0] : memref<8x20xf32, #tpu.memory_space<vmem>>, vector<8x20xf32>
    %c0_1 = arith.constant 0 : index
    %c0_2 = arith.constant 0 : index
    %1 = vector.load %arg2[%c0_1, %c0_2] : memref<20x200xf32, #tpu.memory_space<vmem>>, vector<20x200xf32>
    %cst = arith.constant dense<0.000000e+00> : vector<8x200xf32>
    %2 = tpu.matmul %0, %1, %cst {dimension_numbers = #tpu.dot_dimension_numbers<[1], [0], [0], [1], [0, 0, 1, 1], [], []>} : vector<8x20xf32>, vector<20x200xf32>, vector<8x200xf32> -> vector<8x200xf32>
    %c0_3 = arith.constant 0 : index
    %c0_4 = arith.constant 0 : index
    %3 = vector.load %arg3[%c0_3, %c0_4] : memref<1x200xf32, #tpu.memory_space<vmem>>, vector<1x200xf32>
    %4 = vector.broadcast %3 : vector<1x200xf32> to vector<8x200xf32>
    %5 = arith.addf %2, %4 : vector<8x200xf32>
    %cst_5 = arith.constant 0.000000e+00 : f32
    %6 = vector.broadcast %cst_5 : f32 to vector<8x200xf32>
    %7 = arith.maximumf %5, %6 : vector<8x200xf32>
    %c0_6 = arith.constant 0 : index
    %c0_7 = arith.constant 0 : index
    %8 = vector.load %arg4[%c0_6, %c0_7] : memref<200x20xf32, #tpu.memory_space<vmem>>, vector<200x20xf32>
    %cst_8 = arith.constant dense<0.000000e+00> : vector<8x20xf32>
    %9 = tpu.matmul %7, %8, %cst_8 {dimension_numbers = #tpu.dot_dimension_numbers<[1], [0], [0], [1], [0, 0, 1, 1], [], []>} : vector<8x200xf32>, vector<200x20xf32>, vector<8x20xf32> -> vector<8x20xf32>
    %c0_9 = arith.constant 0 : index
    %c0_10 = arith.constant 0 : index
    %10 = vector.load %arg5[%c0_9, %c0_10] : memref<1x20xf32, #tpu.memory_space<vmem>>, vector<1x20xf32>
    %11 = vector.broadcast %10 : vector<1x20xf32> to vector<8x20xf32>
    %12 = arith.addf %9, %11 : vector<8x20xf32>
    %13 = arith.negf %12 : vector<8x20xf32>
    %14 = math.exp %13 : vector<8x20xf32>
    %cst_11 = arith.constant 1.000000e+00 : f32
    %15 = vector.broadcast %cst_11 : f32 to vector<8x20xf32>
    %16 = arith.addf %15, %14 : vector<8x20xf32>
    %17 = arith.divf %15, %16 : vector<8x20xf32>
    %c0_12 = arith.constant 0 : index
    %c0_13 = arith.constant 0 : index
    %18 = vector.load %arg6[%c0_12, %c0_13] : memref<8x20xf32, #tpu.memory_space<vmem>>, vector<8x20xf32>
    tpu.vector_store %arg6[%c0_12, %c0_13], %17 {strides = array<i32>} : memref<8x20xf32, #tpu.memory_space<vmem>>, vector<8x20xf32>,
    return
  }
  func.func @transform_0(%arg0: i32) -> (i32, i32) {
    %c0_i32 = arith.constant 0 : i32
    %c0_i32_0 = arith.constant 0 : i32
    return %arg0, %c0_i32 : i32, i32
  }
  func.func @transform_1(%arg0: i32) -> (i32, i32) {
    %c0_i32 = arith.constant 0 : i32
    %c0_i32_0 = arith.constant 0 : i32
    %c0_i32_1 = arith.constant 0 : i32
    return %c0_i32, %c0_i32_0 : i32, i32
  }
  func.func @transform_2(%arg0: i32) -> (i32, i32) {
    %c0_i32 = arith.constant 0 : i32
    %c0_i32_0 = arith.constant 0 : i32
    %c0_i32_1 = arith.constant 0 : i32
    return %c0_i32, %c0_i32_0 : i32, i32
  }
  func.func @transform_3(%arg0: i32) -> (i32, i32) {
    %c0_i32 = arith.constant 0 : i32
    %c0_i32_0 = arith.constant 0 : i32
    %c0_i32_1 = arith.constant 0 : i32
    return %c0_i32, %c0_i32_0 : i32, i32
  }
  func.func @transform_4(%arg0: i32) -> (i32, i32) {
    %c0_i32 = arith.constant 0 : i32
    %c0_i32_0 = arith.constant 0 : i32
    %c0_i32_1 = arith.constant 0 : i32
    return %c0_i32, %c0_i32_0 : i32, i32
  }
  func.func @transform_5(%arg0: i32) -> (i32, i32) {
    %c0_i32 = arith.constant 0 : i32
    %c0_i32_0 = arith.constant 0 : i32
    return %arg0, %c0_i32 : i32, i32
  }
}

</mosaic_0001>

<llo_original>
// kernel: uni_feature_forward.1
$region0: #{uni_feature_forward.1}
  #allocation0 [shape = 'u32[]', space=smem, size = 0x4, offset = 0x4, fixed_abs, tag = 'smem constant byte address 0x4 - core index']
  #allocation1 [shape = 'u32[144,128]{1,0:T(1,128)}', space=vmem, size = 0x12000, scoped, tag = 'internal scratch']
  %s0 = inlined_call_operand.vmem [shape: f32[8,20], index: 0, kind: input, shape index: {}]
  %s1 = inlined_call_operand.vmem [shape: f32[20,200], index: 1, kind: input, shape index: {}]
  %s2 = inlined_call_operand.vmem [shape: f32[1,200], index: 2, kind: input, shape index: {}]
  %s3 = inlined_call_operand.vmem [shape: f32[200,20], index: 3, kind: input, shape index: {}]
  %s4 = inlined_call_operand.vmem [shape: f32[1,20], index: 4, kind: input, shape index: {}]
  %s5 = inlined_call_operand.hbm [shape: f32[8,20], index: 5, kind: output, shape index: {}]
  %s6 = sld [smem:[#allocation0]]
  $region30: #{uni_feature_forward.1} parent=0
    _
  %s8 = ssub.s32 1, %s6
  %s9 = scalar_select 0, %s8, %s6
  $region1: #{uni_feature_forward.1} parent=0
    #allocation2 [shape = 'u8[4096]{0}', space=vmem, size = 0x1000, scoped, tag = 'output window, operand 0, single buffered']
    #allocation3 [shape = 's32[1]{0}', space=sflag, size = 0x4, scoped, tag = 'scoped memory for uni_feature_forward.1']
    %10 = vsyncpa [#allocation3], 0
    // Predicated region
    $region2: #{uni_feature_forward.1} parent=1 // pred_check
      _
    $region3: #{uni_feature_forward.1} parent=1 // pred_check_branch
      %12 = sbr.rel (0) target = $region5
    $region4: #{uni_feature_forward.1} parent=1 // pred_region
      _
    $region5: #{uni_feature_forward.1} parent=1 // pred_fallthru
      _
    // Predicated region
    $region6: #{uni_feature_forward.1} parent=1 // pred_check
      _
    $region7: #{uni_feature_forward.1} parent=1 // pred_check_branch
      %14 = sbr.rel (0) target = $region9
    $region8: #{uni_feature_forward.1} parent=1 // pred_region
      _
    $region9: #{uni_feature_forward.1} parent=1 // pred_fallthru
      _
    // Predicated region
    $region10: #{uni_feature_forward.1} parent=1 // pred_check
      _
    $region11: #{uni_feature_forward.1} parent=1 // pred_check_branch
      %16 = sbr.rel (0) target = $region13
    $region12: #{uni_feature_forward.1} parent=1 // pred_region
      _
    $region13: #{uni_feature_forward.1} parent=1 // pred_fallthru
      _
    // Predicated region
    $region14: #{uni_feature_forward.1} parent=1 // pred_check
      _
    $region15: #{uni_feature_forward.1} parent=1 // pred_check_branch
      %18 = sbr.rel (0) target = $region17
    $region16: #{uni_feature_forward.1} parent=1 // pred_region
      _
    $region17: #{uni_feature_forward.1} parent=1 // pred_fallthru
      _
    // Predicated region
    $region18: #{uni_feature_forward.1} parent=1 // pred_check
      _
    $region19: #{uni_feature_forward.1} parent=1 // pred_check_branch
      %20 = sbr.rel (0) target = $region21
    $region20: #{uni_feature_forward.1} parent=1 // pred_region
      _
    $region21: #{uni_feature_forward.1} parent=1 // pred_fallthru
      _
    %v21 = vld [vmem:[%s0] sm:$0xff]
    %v22 = vld [vmem:[%s1] sm:$0xff]
    %v23 = vld [vmem:[%s1 + $0x8] sm:$0xff]
    %v24 = vld [vmem:[%s1 + $0x10] sm:$0xff]
    %v25 = vld [vmem:[%s1 + $0x18] sm:$0xff]
    %v26 = vld [vmem:[%s1 + $0x20] sm:$0xf]
    %v27 = vld [vmem:[%s1 + $0x28] sm:$0xf]
    %v28 = vld [vmem:[%s2] sm:$0x3]
    %v30 = vlaneseq
    %v31 = vshrl.u32 %v30, 7
    %v32 = vsub.s32 0, %v31
    %v33 = vrot.slane %v28, %v32
    %v34 = vlaneseq
    %v35 = vshrl.u32 %v34, 7
    %v36 = vsub.s32 1, %v35
    %v37 = vrot.slane %v28, %v36
    %vm40 = vcmask 162816
    %v42 = vsel %vm40, %v21, 0
    %vm44 = vcmask 1043456
    %v46 = vsel %vm44, %v26, 0
    %v49 = vsel %vm44, %v27, 0
    %51 = vmatprep.subr.mxu0 %v23
    %52 = vmatpush1.msra.mxu0 %v22
    %53 = vmatprep.subr.mxu0 %v25
    %54 = vmatpush1.msra.mxu0 %v24
    %55 = vmatprep.subr.mxu0 %v49
    %56 = vmatpush1.msra.mxu0 %v46
    %57 = vmatprep.subr.mxu0 0.0
    %58 = vmatpush1.msra.mxu0 0.0
    %59 = vmatprep.subr.mxu0 0.0
    %60 = vmatpush1.msra.mxu0 0.0
    %61 = vmatprep.subr.mxu0 0.0
    %62 = vmatpush1.msra.mxu0 0.0
    %63 = vmatprep.subr.mxu0 0.0
    %64 = vmatpush1.msra.mxu0 0.0
    %65 = vmatprep.subr.mxu0 0.0
    %66 = vmatpush1.msra.mxu0 0.0
    %67 = vmatprep.subr.mxu0 0.0
    %68 = vmatpush1.msra.mxu0 0.0
    %69 = vmatprep.subr.mxu0 0.0
    %70 = vmatpush1.msra.mxu0 0.0
    %71 = vmatprep.subr.mxu0 0.0
    %72 = vmatpush1.msra.mxu0 0.0
    %73 = vmatprep.subr.mxu0 0.0
    %74 = vmatpush1.msra.mxu0 0.0
    %75 = vmatprep.subr.mxu0 0.0
    %76 = vmatpush1.msra.mxu0 0.0
    %77 = vmatprep.subr.mxu0 0.0
    %78 = vmatpush1.msra.mxu0 0.0
    %79 = vmatprep.subr.mxu0 0.0
    %80 = vmatpush1.msra.mxu0 0.0
    %81 = vmatprep.subr.mxu0 0.0
    %82 = vmatpush1.msra.mxu0 0.0
    %83 = vmatprep.subr.mxu0 0.0
    %84 = vmatpush1.msra.mxu0 0.0
    %85 = vmatprep.subr.mxu0 0.0
    %86 = vmatpush1.msra.mxu0 0.0
    %87 = vmatprep.subr.mxu0 0.0
    %88 = vmatpush1.msra.mxu0 0.0
    %89 = vmatprep.subr.mxu0 0.0
    %90 = vmatpush1.msra.mxu0 0.0
    %91 = vmatprep.subr.mxu0 0.0
    %92 = vmatpush1.msra.mxu0 0.0
    %93 = vmatprep.subr.mxu0 0.0
    %94 = vmatpush1.msra.mxu0 0.0
    %95 = vmatprep.subr.mxu0 0.0
    %96 = vmatpush1.msra.mxu0 0.0
    %97 = vmatprep.subr.mxu0 0.0
    %98 = vmatpush1.msra.mxu0 0.0
    %99 = vmatprep.subr.mxu0 0.0
    %100 = vmatpush1.msra.mxu0 0.0
    %101 = vmatprep.subr.mxu0 0.0
    %102 = vmatpush1.msra.mxu0 0.0
    %103 = vmatprep.subr.mxu0 0.0
    %104 = vmatpush1.msra.mxu0 0.0
    %105 = vmatprep.subr.mxu0 0.0
    %106 = vmatpush1.msra.mxu0 0.0
    %107 = vmatprep.subr.mxu0 0.0
    %108 = vmatpush1.msra.mxu0 0.0
    %109 = vmatprep.subr.mxu0 0.0
    %110 = vmatpush1.msra.mxu0 0.0
    %111 = vmatprep.subr.mxu0 0.0
    %112 = vmatpush1.msra.mxu0 0.0
    %113 = vmatprep.subr.mxu0 0.0
    %114 = vmatpush1.msra.mxu0 0.0
    %115 = vmatprep.mubr.f32.mxu0 0.0
    %116 = vmatmul.mubr.f32.gmra.mrb[0].mxu0 %v42
    %v117 = vpop.f32.mrb[0].mxu0
    %v118 = vadd.f32 %v33, %v117
    %v119 = vpop.f32.mrb[0].mxu0
    %v120 = vadd.f32 %v37, %v119
    %121 = vdwg.mxu0
    %v122 = vmax.f32 %v118, 0.0
    %v123 = vmax.f32 %v120, 0.0
    %v124 = vld [vmem:[%s3] sm:$0xff]
    %v125 = vld [vmem:[%s3 + $0x8] sm:$0xff]
    %v126 = vld [vmem:[%s3 + $0x10] sm:$0xff]
    %v127 = vld [vmem:[%s3 + $0x18] sm:$0xff]
    %v128 = vld [vmem:[%s3 + $0x20] sm:$0xff]
    %v129 = vld [vmem:[%s3 + $0x28] sm:$0xff]
    %v130 = vld [vmem:[%s3 + $0x30] sm:$0xff]
    %v131 = vld [vmem:[%s3 + $0x38] sm:$0xff]
    %v132 = vld [vmem:[%s3 + $0x40] sm:$0xff]
    %v133 = vld [vmem:[%s3 + $0x48] sm:$0xff]
    %v134 = vld [vmem:[%s3 + $0x50] sm:$0xff]
    %v135 = vld [vmem:[%s3 + $0x58] sm:$0xff]
    %v136 = vld [vmem:[%s3 + $0x60] sm:$0xff]
    %v137 = vld [vmem:[%s3 + $0x68] sm:$0xff]
    %v138 = vld [vmem:[%s3 + $0x70] sm:$0xff]
    %v139 = vld [vmem:[%s3 + $0x78] sm:$0xff]
    %v140 = vld [vmem:[%s3 + $0x80] sm:$0xff]
    %v141 = vld [vmem:[%s3 + $0x88] sm:$0xff]
    %v142 = vld [vmem:[%s3 + $0x90] sm:$0xff]
    %v143 = vld [vmem:[%s3 + $0x98] sm:$0xff]
    %v144 = vld [vmem:[%s3 + $0xa0] sm:$0xff]
    %v145 = vld [vmem:[%s3 + $0xa8] sm:$0xff]
    %v146 = vld [vmem:[%s3 + $0xb0] sm:$0xff]
    %v147 = vld [vmem:[%s3 + $0xb8] sm:$0xff]
    %v148 = vld [vmem:[%s3 + $0xc0] sm:$0xff]
    %v149 = vld [vmem:[%s4] sm:$0x1]
    %v151 = vlaneseq
    %v152 = vshrl.u32 %v151, 7
    %v153 = vsub.s32 0, %v152
    %v154 = vrot.slane %v149, %v153
    %vm156 = vcmask 588800
    %v158 = vsel %vm156, %v123, 0
    %160 = vmatprep.subr.mxu0 0.0
    %161 = vmatpush1.msra.mxu0 %v124
    %162 = vmatprep.subr.mxu0 0.0
    %163 = vmatpush1.msra.mxu0 %v125
    %164 = vmatprep.subr.mxu0 0.0
    %165 = vmatpush1.msra.mxu0 %v126
    %166 = vmatprep.subr.mxu0 0.0
    %167 = vmatpush1.msra.mxu0 %v127
    %168 = vmatprep.subr.mxu0 0.0
    %169 = vmatpush1.msra.mxu0 %v128
    %170 = vmatprep.subr.mxu0 0.0
    %171 = vmatpush1.msra.mxu0 %v129
    %172 = vmatprep.subr.mxu0 0.0
    %173 = vmatpush1.msra.mxu0 %v130
    %174 = vmatprep.subr.mxu0 0.0
    %175 = vmatpush1.msra.mxu0 %v131
    %176 = vmatprep.subr.mxu0 0.0
    %177 = vmatpush1.msra.mxu0 %v132
    %178 = vmatprep.subr.mxu0 0.0
    %179 = vmatpush1.msra.mxu0 %v133
    %180 = vmatprep.subr.mxu0 0.0
    %181 = vmatpush1.msra.mxu0 %v134
    %182 = vmatprep.subr.mxu0 0.0
    %183 = vmatpush1.msra.mxu0 %v135
    %184 = vmatprep.subr.mxu0 0.0
    %185 = vmatpush1.msra.mxu0 %v136
    %186 = vmatprep.subr.mxu0 0.0
    %187 = vmatpush1.msra.mxu0 %v137
    %188 = vmatprep.subr.mxu0 0.0
    %189 = vmatpush1.msra.mxu0 %v138
    %190 = vmatprep.subr.mxu0 0.0
    %191 = vmatpush1.msra.mxu0 %v139
    %192 = vmatprep.subr.mxu0 0.0
    %193 = vmatpush1.msra.mxu0 %v140
    %194 = vmatprep.subr.mxu0 0.0
    %195 = vmatpush1.msra.mxu0 %v141
    %196 = vmatprep.subr.mxu0 0.0
    %197 = vmatpush1.msra.mxu0 %v142
    %198 = vmatprep.subr.mxu0 0.0
    %199 = vmatpush1.msra.mxu0 %v143
    %200 = vmatprep.subr.mxu0 0.0
    %201 = vmatpush1.msra.mxu0 %v144
    %202 = vmatprep.subr.mxu0 0.0
    %203 = vmatpush1.msra.mxu0 %v145
    %204 = vmatprep.subr.mxu0 0.0
    %205 = vmatpush1.msra.mxu0 %v146
    %206 = vmatprep.subr.mxu0 0.0
    %207 = vmatpush1.msra.mxu0 %v147
    %208 = vmatprep.subr.mxu0 0.0
    %209 = vmatpush1.msra.mxu0 %v148
    %210 = vmatprep.subr.mxu0 0.0
    %211 = vmatpush1.msra.mxu0 0.0
    %212 = vmatprep.subr.mxu0 0.0
    %213 = vmatpush1.msra.mxu0 0.0
    %214 = vmatprep.subr.mxu0 0.0
    %215 = vmatpush1.msra.mxu0 0.0
    %216 = vmatprep.subr.mxu0 0.0
    %217 = vmatpush1.msra.mxu0 0.0
    %218 = vmatprep.subr.mxu0 0.0
    %219 = vmatpush1.msra.mxu0 0.0
    %220 = vmatprep.subr.mxu0 0.0
    %221 = vmatpush1.msra.mxu0 0.0
    %222 = vmatprep.subr.mxu0 0.0
    %223 = vmatpush1.msra.mxu0 0.0
    %224 = vmatprep.mubr.f32.mxu0 %v158
    %225 = vmatmul.mubr.f32.gmra.mrb[0].mxu0 %v122
    %v226 = vpop.f32.mrb[0].mxu0
    %v227 = vadd.f32 %v154, %v226
    %v228 = vpop.f32.mrb[0].mxu0
    %229 = vdwg.mxu0
    %v230 = vxor.u32 %v227, 2147483648
    %v231 = vmul.f32 %v230, 1.442695
    %v232 = vpow.pop %v231
    %v233 = vadd.f32 %v232, 1.0
    %v234 = vrcp.pop %v233
    %v235 = vmul.f32 1.0, %v234
    %236 = vst.msk [vmem:[#allocation2] sm:$0xff] %vm40, %v235
    // Predicated region
    $region22: #{uni_feature_forward.1} parent=1 // pred_check
      _
    $region23: #{uni_feature_forward.1} parent=1 // pred_check_branch
      %238 = sbr.rel (0) target = $region25
    $region24: #{uni_feature_forward.1} parent=1 // pred_region
      %s240 = ssub.s32 128, 128
      %241 = vsyncadd [#allocation3], %s240
      %s243 = sshll.u32 [#allocation2], 4
      %s244 = int_to_ptr.vmem [resolvable:$true] %s243
      %246 = dma.vmem_to_hbm [thread:$0]  %s244, 128, %s5, [#allocation3]
    $region25: #{uni_feature_forward.1} parent=1 // pred_fallthru
      _
    // Predicated region
    $region26: #{uni_feature_forward.1} parent=1 // pred_check
      _
    $region27: #{uni_feature_forward.1} parent=1 // pred_check_branch
      %248 = sbr.rel (0) target = $region29
    $region28: #{uni_feature_forward.1} parent=1 // pred_region
      %249 = dma.done [#allocation3], 128
    $region29: #{uni_feature_forward.1} parent=1 // pred_fallthru
      _
    %250 = vsyncpa [#allocation3], 1

</llo_original>
